<compile_context>
chip_gen: v7x
topology: tpu7x:2x2x1
jax: 0.10.0
libtpu: 0.0.40
codegen_flags: <defaults>
</compile_context>

<pallas_src>
import jax
import jax.numpy as jnp
from jax.experimental import pallas as pl
from jax.experimental.pallas import tpu as pltpu

N_BITS = 8
QUANT_MAX = 2 ** (N_BITS - 1)        # 128   (matches the module, not torch.qint8)
QUANT_MIN = -(2 ** (N_BITS - 1))     # -128
EPS = 1e-5
CLIP_LO = -(2.0 ** 15)
CLIP_HI = 2.0 ** 15 - 1.0

_LANE_CANDIDATES = (4096, 2048, 1024, 512, 256, 128)
_TARGET_BLOCK_BYTES = 8 * 1024 * 1024     # 8 MiB blocks (per-step overhead <~6% on v7x)
_SMALL_TENSOR_BYTES = 2 * 1024 * 1024     # below this a single block is fine


# ---------------------------------------------------------------------------
# Generation-aware knobs (safe fallbacks everywhere)
# ---------------------------------------------------------------------------
_VMEM_LIMIT_CACHE = None


def _vmem_limit_bytes():
    """3/4 of detected physical VMEM, capped at 64 MiB (v7x ends up ~48 MiB)."""
    global _VMEM_LIMIT_CACHE
    if _VMEM_LIMIT_CACHE is None:
        phys = 128 * 1024 * 1024
        try:
            info = pltpu.get_tpu_info()
            v = int(getattr(info, "vmem_capacity_bytes", 0) or 0)
            if v > 0:
                phys = v
        except Exception:
            try:
                if "v7" in jax.devices()[0].device_kind.lower():
                    phys = 64 * 1024 * 1024
            except Exception:
                pass
        _VMEM_LIMIT_CACHE = min(64 * 1024 * 1024,
                                max(32 * 1024 * 1024, (phys * 3) // 4))
    return _VMEM_LIMIT_CACHE


def _is_pre_v6():
    try:
        kind = jax.devices()[0].device_kind.lower()
        return any(t in kind for t in ("v2", "v3", "v4", "v5"))
    except Exception:
        return False


def _acc_dtype(x_dtype):
    """min/max are exact in any float format; bf16 halves traffic on v6e/v7x."""
    if jnp.dtype(x_dtype) == jnp.dtype(jnp.bfloat16) and not _is_pre_v6():
        return jnp.bfloat16
    return jnp.float32


def _sublane_tile(dtype):
    itemsize = jnp.dtype(dtype).itemsize
    return max(8, 32 // itemsize)          # 8 for 4B, 16 for 2B, 32 for 1B


# ---------------------------------------------------------------------------
# Layout planning: lane-dense (rows, W) slab + row-block size
# ---------------------------------------------------------------------------
def _plan(n, dtype):
    """Choose (W, rows, row_block, pad_elems) for an n-element tensor."""
    itemsize = jnp.dtype(dtype).itemsize
    sub = _sublane_tile(dtype)
    pad = 0
    for W in _LANE_CANDIDATES:
        if n >= W and n % W == 0:
            break
    else:
        # TODO(synk): handle n % 128 != 0 with an in-kernel lane mask on a 1D view
        # instead of this (rare, < 128-element) pad copy.
        W = 128
        pad = (-n) % W
    rows = (n + pad) // W

    if rows <= sub:
        return W, rows, rows, pad          # single full-array block (always legal)

    row_bytes = W * itemsize
    total_bytes = rows * row_bytes
    max_rows = max(sub, (_TARGET_BLOCK_BYTES // row_bytes) // sub * sub)
    if total_bytes > _SMALL_TENSOR_BYTES:
        # keep >= 4 blocks so megacore sharding / pipelining have work to split
        max_rows = min(max_rows, max(sub, (rows // 4) // sub * sub))
    rb = min(max_rows, (rows // sub) * sub)
    return W, rows, rb, pad


def _to_slab(x):
    """View x as a lane-dense (rows, W) slab; pad only when n % 128 != 0."""
    n = x.size
    W, rows, rb, pad = _plan(n, x.dtype)
    flat = jnp.ravel(x)
    if pad:
        # pad with an existing element: min/max unaffected, sliced off for fake-quant
        flat = jnp.concatenate([flat, jnp.broadcast_to(flat[:1], (pad,))])
    return flat.reshape(rows, W), rb, n, pad


# ---------------------------------------------------------------------------
# Kernel 1: running min/max over the tensor (observer path)
#   Per grid step: reduce the (rb, W) block over sublane groups (VPU) and fold it
#   into a small (acc_rows, W) accumulator.  Final step writes the accumulator to
#   a per-core partial-result tile; the wrapper does the last tiny reduce + clip.
# ---------------------------------------------------------------------------
def _make_minmax_kernel(rows, rb, W, acc_rows, groups, steps, ragged, acc_dtype):
    def kernel(x_ref, min_ref, max_ref, min_acc, max_acc):
        c = pl.program_id(0)
        i = pl.program_id(1)

        @pl.when(i == 0)
        def _():
            min_acc[...] = jnp.full((acc_rows, W), jnp.inf, acc_dtype)
            max_acc[...] = jnp.full((acc_rows, W), -jnp.inf, acc_dtype)

        x = x_ref[...].astype(acc_dtype)
        if ragged:
            blk = c * steps + i
            ridx = blk * rb + jax.lax.broadcasted_iota(jnp.int32, (rb, W), 0)
            valid = ridx < rows
            xmin = jnp.where(valid, x, jnp.inf)
            xmax = jnp.where(valid, x, -jnp.inf)
        else:
            xmin = x
            xmax = x
        if groups > 1:
            xmin = jnp.min(xmin.reshape(groups, acc_rows, W), axis=0)
            xmax = jnp.max(xmax.reshape(groups, acc_rows, W), axis=0)
        min_acc[...] = jnp.minimum(min_acc[...], xmin)
        max_acc[...] = jnp.maximum(max_acc[...], xmax)

        @pl.when(i == steps - 1)
        def _():
            min_ref[...] = min_acc[...]
            max_ref[...] = max_acc[...]

    return kernel


def _minmax_pallas(x2d, rb):
    rows, W = x2d.shape
    blocks = pl.cdiv(rows, rb)
    split = 2 if (blocks >= 2 and blocks % 2 == 0) else 1   # v7x: one half per core
    steps = blocks // split
    ragged = (rows % rb) != 0
    acc_dtype = _acc_dtype(x2d.dtype)
    acc_tile = 16 if jnp.dtype(acc_dtype) == jnp.dtype(jnp.bfloat16) else 8
    if rb % acc_tile == 0:
        acc_rows, groups = acc_tile, rb // acc_tile
    else:
        acc_rows, groups = rb, 1            # tiny single-block case

    kernel = _make_minmax_kernel(rows, rb, W, acc_rows, groups, steps, ragged,
                                 acc_dtype)
    out_struct = jax.ShapeDtypeStruct((split * acc_rows, W), acc_dtype)
    out_spec = pl.BlockSpec((acc_rows, W), lambda c, i: (c, 0))
    mn_part, mx_part = pl.pallas_call(
        kernel,
        out_shape=(out_struct, out_struct),
        grid=(split, steps),
        in_specs=[pl.BlockSpec((rb, W), lambda c, i: (c * steps + i, 0))],
        out_specs=(out_spec, out_spec),
        scratch_shapes=[pltpu.VMEM((acc_rows, W), acc_dtype),
                        pltpu.VMEM((acc_rows, W), acc_dtype)],
        compiler_params=pltpu.CompilerParams(
            dimension_semantics=("parallel", "arbitrary"),
            vmem_limit_bytes=_vmem_limit_bytes()),
    )(x2d)
    # clip commutes with min/max -> apply once to the final scalars
    mn = jnp.clip(jnp.min(mn_part).astype(jnp.float32), CLIP_LO, CLIP_HI)
    mx = jnp.clip(jnp.max(mx_part).astype(jnp.float32), CLIP_LO, CLIP_HI)
    return mn, mx


# ---------------------------------------------------------------------------
# Kernel 2: fake quant/dequant  (observe=False path)
#   y = clamp(round(x * inv_scale), qmin - zp, qmax - zp) * scale
#   (zero point folded into the clamp bounds -> 2 fewer VPU adds per element)
#   params = [scale, 1/scale, qmin-zp, qmax-zp] live in one small SMEM input.
# ---------------------------------------------------------------------------
def _fakequant_kernel(params_ref, x_ref, o_ref):
    s = params_ref[0]
    inv = params_ref[1]
    lo = params_ref[2]
    hi = params_ref[3]
    q = jnp.clip(jnp.round(x_ref[...].astype(jnp.float32) * inv), lo, hi)
    o_ref[...] = (q * s).astype(o_ref.dtype)


def _fakequant_pallas(x2d, rb, scale, zero_point_f, qmin, qmax):
    rows, W = x2d.shape
    blocks = pl.cdiv(rows, rb)
    s = jnp.asarray(scale, jnp.float32)
    zp = jnp.asarray(zero_point_f, jnp.float32)
    # TODO(synk): round(x * (1/scale)) can differ from torch's round(x / scale) by
    # one quantization step at exact rounding boundaries.
    params = jnp.stack([s, jnp.float32(1.0) / s,
                        jnp.float32(qmin) - zp,
                        jnp.float32(qmax) - zp]).astype(jnp.float32)
    return pl.pallas_call(
        _fakequant_kernel,
        out_shape=jax.ShapeDtypeStruct((rows, W), x2d.dtype),
        grid=(blocks,),
        in_specs=[pl.BlockSpec(memory_space=pltpu.MemorySpace.SMEM),
                  pl.BlockSpec((rb, W), lambda i: (i, 0))],
        out_specs=pl.BlockSpec((rb, W), lambda i: (i, 0)),
        compiler_params=pltpu.CompilerParams(
            dimension_semantics=("parallel",),
            vmem_limit_bytes=_vmem_limit_bytes()),
    )(params, x2d)


# ---------------------------------------------------------------------------
# QFakeStub wrapper (state lives in plain Python / JAX scalars)
# ---------------------------------------------------------------------------
class QFakeStubPallas:
    def __init__(self, n_bits: int = N_BITS, eps: float = EPS):
        self.observe = True
        self.n_bits = n_bits
        self.quant_max = 2 ** (n_bits - 1)
        self.quant_min = -(2 ** (n_bits - 1))
        self.eps = jnp.float32(eps)
        self.scale = jnp.float32(1.0)
        self.zero_point = jnp.int32(0)
        # observer running range
        self._min_val = jnp.float32(jnp.inf)
        self._max_val = jnp.float32(-jnp.inf)
        # TODO(synk): torch's default_histogram_observer also builds a 2048-bin
        # histogram used only inside observer.calculate_qparams(); this module's
        # update_qparams() only reads observer.min_val/max_val, so only the
        # running min/max is reproduced here.

    def update_qparams(self):
        max_val_pos = jnp.maximum(self._max_val, 0.0)
        min_val_neg = jnp.minimum(self._min_val, 0.0)
        scale_raw = (max_val_pos - min_val_neg) / float(self.quant_max - self.quant_min)
        self.scale = jnp.maximum(scale_raw, self.eps)
        # guard the degenerate min==max==0 case (torch would divide 0/0 -> NaN)
        safe_scale = jnp.where(scale_raw > 0, scale_raw, jnp.float32(1.0))
        zp = self.quant_min - jnp.round(min_val_neg / safe_scale)
        self.zero_point = jnp.clip(zp, self.quant_min, self.quant_max).astype(jnp.int32)

    def calculate_qparams(self):
        self.update_qparams()
        return self.scale, self.zero_point

    def __call__(self, x):
        x2d, rb, n, pad = _to_slab(x)
        if self.observe:
            mn, mx = _minmax_pallas(x2d, rb)              # Pallas reduction kernel
            self._min_val = jnp.minimum(self._min_val, mn)
            self._max_val = jnp.maximum(self._max_val, mx)
            self.update_qparams()
            return x
        y2d = _fakequant_pallas(x2d, rb, self.scale,
                                self.zero_point.astype(jnp.float32),
                                self.quant_min, self.quant_max)
        if pad:
            return y2d.reshape(-1)[:n].reshape(x.shape)
        return y2d.reshape(x.shape)


# ---------------------------------------------------------------------------
if __name__ == "__main__":
    key = jax.random.PRNGKey(0)
    # NCHW input, same convention as the PyTorch module's typical usage.
    x = jax.random.normal(key, (2, 4, 16, 16), dtype=jnp.float32) * 3.0

    stub = QFakeStubPallas()

    # --- observe path (default) -------------------------------------------
    y_obs = jax.block_until_ready(stub(x))
    assert y_obs.shape == x.shape
    assert bool(jnp.allclose(y_obs, x))                   # observe path is identity on x

    xc = jnp.clip(x, CLIP_LO, CLIP_HI)
    ref_min, ref_max = jnp.min(xc), jnp.max(xc)
    assert bool(jnp.allclose(stub._min_val, ref_min))
    assert bool(jnp.allclose(stub._max_val, ref_max))
    ref_scale = jnp.maximum(
        (jnp.maximum(ref_max, 0.0) - jnp.minimum(ref_min, 0.0)) / 256.0, EPS)
    assert bool(jnp.allclose(stub.scale, ref_scale, rtol=1e-6))

    # --- fake-quant path ----------------------------------------------------
    stub.observe = False
    y_fq = jax.block_until_ready(stub(x))
    assert y_fq.shape == x.shape and y_fq.dtype == x.dtype

    s = stub.scale
    zpf = stub.zero_point.astype(jnp.float32)

    # reference A: same reciprocal-multiply math as the kernel (zp not folded)
    ref_q_a = jnp.clip(jnp.round(x * (jnp.float32(1.0) / s)) + zpf, QUANT_MIN, QUANT_MAX)
    ref_a = (ref_q_a - zpf) * s
    assert bool(jnp.allclose(y_fq, ref_a, atol=1e-5, rtol=1e-5))

    # reference B: division form (torch semantics); allow at most one quant step
    ref_q_b = jnp.clip(jnp.round(x / s) + zpf, QUANT_MIN, QUANT_MAX)
    ref_b = (ref_q_b - zpf) * s
    diff = jnp.abs(y_fq - ref_b)
    assert bool(jnp.all(jnp.minimum(diff, jnp.abs(diff - s)) <= 1e-4))

    # --- second small shape: exercises multi-block grid, the masked ragged
    #     tail block and the 2-way core split of the observer reduction -------
    x2 = jax.random.normal(jax.random.PRNGKey(0), (2, 4, 24, 40), jnp.float32) * 2.0
    stub2 = QFakeStubPallas()
    _ = jax.block_until_ready(stub2(x2))
    xc2 = jnp.clip(x2, CLIP_LO, CLIP_HI)
    assert bool(jnp.allclose(stub2._min_val, jnp.min(xc2)))
    assert bool(jnp.allclose(stub2._max_val, jnp.max(xc2)))
    stub2.observe = False
    y2 = jax.block_until_ready(stub2(x2))
    s2 = stub2.scale
    zpf2 = stub2.zero_point.astype(jnp.float32)
    ref2_q = jnp.clip(jnp.round(x2 * (jnp.float32(1.0) / s2)) + zpf2,
                      QUANT_MIN, QUANT_MAX)
    ref2 = (ref2_q - zpf2) * s2
    assert bool(jnp.allclose(y2, ref2, atol=1e-5, rtol=1e-5))

    print("KERNEL_OK")
</pallas_src>

<mosaic_0001>
module attributes {stable_mosaic.version = 11 : i64} {
  func.func @kernel(%arg0: i32, %arg1: i32, %arg2: memref<1x2048xf32, #tpu.memory_space<vmem>>, %arg3: memref<1x2048xf32, #tpu.memory_space<vmem>>, %arg4: memref<1x2048xf32, #tpu.memory_space<vmem>>, %arg5: memref<1x2048xf32, #tpu.memory_space<vmem>>, %arg6: memref<1x2048xf32, #tpu.memory_space<vmem>>) attributes {dimension_semantics = [#tpu.dimension_semantics<parallel>, #tpu.dimension_semantics<arbitrary>], iteration_bounds = array<i64: 1, 1>, scalar_prefetch = 0 : i64, scratch_operands = 2 : i64, tpu.core_type = #tpu.core_type<tc>, window_params = [{transform_indices = @transform_0, window_bounds = array<i64: 1, 2048>}, {transform_indices = @transform_1, window_bounds = array<i64: 1, 2048>}, {transform_indices = @transform_2, window_bounds = array<i64: 1, 2048>}]} {
    %c0_i32 = arith.constant 0 : i32
    %0 = arith.cmpi eq, %arg1, %c0_i32 : i32
    %1 = arith.extui %0 : i1 to i32
    %c0_i32_0 = arith.constant 0 : i32
    %2 = arith.cmpi ne, %1, %c0_i32_0 : i32
    scf.if %2 {
      %cst = arith.constant 0x7F800000 : f32
      %13 = vector.broadcast %cst : f32 to vector<1x2048xf32>
      %c0_12 = arith.constant 0 : index
      %c0_13 = arith.constant 0 : index
      %14 = vector.load %arg5[%c0_12, %c0_13] : memref<1x2048xf32, #tpu.memory_space<vmem>>, vector<1x2048xf32>
      tpu.vector_store %arg5[%c0_12, %c0_13], %13 {strides = array<i32>} : memref<1x2048xf32, #tpu.memory_space<vmem>>, vector<1x2048xf32>,
      %cst_14 = arith.constant 0xFF800000 : f32
      %15 = vector.broadcast %cst_14 : f32 to vector<1x2048xf32>
      %c0_15 = arith.constant 0 : index
      %c0_16 = arith.constant 0 : index
      %16 = vector.load %arg6[%c0_15, %c0_16] : memref<1x2048xf32, #tpu.memory_space<vmem>>, vector<1x2048xf32>
      tpu.vector_store %arg6[%c0_15, %c0_16], %15 {strides = array<i32>} : memref<1x2048xf32, #tpu.memory_space<vmem>>, vector<1x2048xf32>,
    } else {
    }
    %c0 = arith.constant 0 : index
    %c0_1 = arith.constant 0 : index
    %3 = vector.load %arg2[%c0, %c0_1] : memref<1x2048xf32, #tpu.memory_space<vmem>>, vector<1x2048xf32>
    %c0_2 = arith.constant 0 : index
    %c0_3 = arith.constant 0 : index
    %4 = vector.load %arg5[%c0_2, %c0_3] : memref<1x2048xf32, #tpu.memory_space<vmem>>, vector<1x2048xf32>
    %5 = arith.minimumf %4, %3 : vector<1x2048xf32>
    %c0_4 = arith.constant 0 : index
    %c0_5 = arith.constant 0 : index
    %6 = vector.load %arg5[%c0_4, %c0_5] : memref<1x2048xf32, #tpu.memory_space<vmem>>, vector<1x2048xf32>
    tpu.vector_store %arg5[%c0_4, %c0_5], %5 {strides = array<i32>} : memref<1x2048xf32, #tpu.memory_space<vmem>>, vector<1x2048xf32>,
    %c0_6 = arith.constant 0 : index
    %c0_7 = arith.constant 0 : index
    %7 = vector.load %arg6[%c0_6, %c0_7] : memref<1x2048xf32, #tpu.memory_space<vmem>>, vector<1x2048xf32>
    %8 = arith.maximumf %7, %3 : vector<1x2048xf32>
    %c0_8 = arith.constant 0 : index
    %c0_9 = arith.constant 0 : index
    %9 = vector.load %arg6[%c0_8, %c0_9] : memref<1x2048xf32, #tpu.memory_space<vmem>>, vector<1x2048xf32>
    tpu.vector_store %arg6[%c0_8, %c0_9], %8 {strides = array<i32>} : memref<1x2048xf32, #tpu.memory_space<vmem>>, vector<1x2048xf32>,
    %c0_i32_10 = arith.constant 0 : i32
    %10 = arith.cmpi eq, %arg1, %c0_i32_10 : i32
    %11 = arith.extui %10 : i1 to i32
    %c0_i32_11 = arith.constant 0 : i32
    %12 = arith.cmpi ne, %11, %c0_i32_11 : i32
    scf.if %12 {
      %c0_12 = arith.constant 0 : index
      %c0_13 = arith.constant 0 : index
      %13 = vector.load %arg5[%c0_12, %c0_13] : memref<1x2048xf32, #tpu.memory_space<vmem>>, vector<1x2048xf32>
      %c0_14 = arith.constant 0 : index
      %c0_15 = arith.constant 0 : index
      %14 = vector.load %arg3[%c0_14, %c0_15] : memref<1x2048xf32, #tpu.memory_space<vmem>>, vector<1x2048xf32>
      tpu.vector_store %arg3[%c0_14, %c0_15], %13 {strides = array<i32>} : memref<1x2048xf32, #tpu.memory_space<vmem>>, vector<1x2048xf32>,
      %c0_16 = arith.constant 0 : index
      %c0_17 = arith.constant 0 : index
      %15 = vector.load %arg6[%c0_16, %c0_17] : memref<1x2048xf32, #tpu.memory_space<vmem>>, vector<1x2048xf32>
      %c0_18 = arith.constant 0 : index
      %c0_19 = arith.constant 0 : index
      %16 = vector.load %arg4[%c0_18, %c0_19] : memref<1x2048xf32, #tpu.memory_space<vmem>>, vector<1x2048xf32>
      tpu.vector_store %arg4[%c0_18, %c0_19], %15 {strides = array<i32>} : memref<1x2048xf32, #tpu.memory_space<vmem>>, vector<1x2048xf32>,
    } else {
    }
    return
  }
  func.func @transform_0(%arg0: i32, %arg1: i32) -> (i32, i32) {
    %c1_i32 = arith.constant 1 : i32
    %0 = arith.muli %arg0, %c1_i32 : i32
    %1 = arith.addi %0, %arg1 : i32
    %c0_i32 = arith.constant 0 : i32
    %c0_i32_0 = arith.constant 0 : i32
    return %1, %c0_i32 : i32, i32
  }
  func.func @transform_1(%arg0: i32, %arg1: i32) -> (i32, i32) {
    %c0_i32 = arith.constant 0 : i32
    %c0_i32_0 = arith.constant 0 : i32
    return %arg0, %c0_i32 : i32, i32
  }
  func.func @transform_2(%arg0: i32, %arg1: i32) -> (i32, i32) {
    %c0_i32 = arith.constant 0 : i32
    %c0_i32_0 = arith.constant 0 : i32
    return %arg0, %c0_i32 : i32, i32
  }
}

</mosaic_0001>

<llo_original>
// kernel: tpu_custom_call.1
$region0: #{tpu_custom_call.1}
  #allocation0 [shape = 'u32[]', space=smem, size = 0x4, offset = 0x4, fixed_abs, tag = 'smem constant byte address 0x4 - core index']
  #allocation1 [shape = 'u32[144,128]{1,0:T(1,128)}', space=vmem, size = 0x12000, scoped, tag = 'internal scratch']
  #allocation2 [shape = 'f32[1,2048]{1,0:T(1,128)}', space=vmem, size = 0x2000, scoped, tag = 'scratch operand']
  #allocation3 [shape = 'f32[1,2048]{1,0:T(1,128)}', space=vmem, size = 0x2000, scoped, tag = 'scratch operand']
  %s0 = inlined_call_operand.hbm [shape: f32[1,2048], index: 0, kind: input, shape index: {}]
  %s1 = inlined_call_operand.hbm [shape: f32[1,2048], index: 1, kind: output, shape index: {0}]
  %s2 = inlined_call_operand.hbm [shape: f32[1,2048], index: 2, kind: output, shape index: {1}]
  %3 = xla_tuple %s1, %s2
  %s4 = sld [smem:[#allocation0]]
  $region34: #{tpu_custom_call.1} parent=0
    _
  %s6 = ssub.s32 1, %s4
  %s7 = scalar_select 0, %s6, %s4
  $region1: #{tpu_custom_call.1} parent=0
    #allocation4 [shape = 'u8[8192]{0}', space=vmem, size = 0x2000, scoped, tag = 'input window, operand 0, single buffered']
    #allocation5 [shape = 's32[1]{0}', space=sflag, size = 0x4, scoped, tag = 'scoped memory for tpu_custom_call.1']
    #allocation6 [shape = 's32[1]{0}', space=sflag, size = 0x4, scoped, tag = 'scoped memory for tpu_custom_call.1']
    #allocation7 [shape = 'u8[8192]{0}', space=vmem, size = 0x2000, scoped, tag = 'output window, operand 0, single buffered']
    #allocation8 [shape = 'u8[8192]{0}', space=vmem, size = 0x2000, scoped, tag = 'output window, operand 1, single buffered']
    #allocation9 [shape = 's32[1]{0}', space=sflag, size = 0x4, scoped, tag = 'scoped memory for tpu_custom_call.1']
    %8 = vsyncpa [#allocation5], 0
    %9 = vsyncpa [#allocation6], 0
    %10 = vsyncpa [#allocation9], 0
    // Predicated region
    $region2: #{tpu_custom_call.1} parent=1 // pred_check
      _
    $region3: #{tpu_custom_call.1} parent=1 // pred_check_branch
      %12 = sbr.rel (0) target = $region5
    $region4: #{tpu_custom_call.1} parent=1 // pred_region
      %s13 = sadd.s32 0, 0
      %s15 = ssub.s32 256, 256
      %16 = vsyncadd [#allocation5], %s15
      %s17 = smul.addr %s13, 16
      %s18 = smul.addr %s17, 16
      %s19 = scalar_lea.hbm %s0, %s18
      %s21 = sshll.u32 [#allocation4], 4
      %s22 = int_to_ptr.vmem [resolvable:$true] %s21
      %24 = dma.hbm_to_vmem [thread:$0]  %s19, 256, %s22, [#allocation5]
    $region5: #{tpu_custom_call.1} parent=1 // pred_fallthru
      _
    // Predicated region
    $region6: #{tpu_custom_call.1} parent=1 // pred_check
      _
    $region7: #{tpu_custom_call.1} parent=1 // pred_check_branch
      %26 = sbr.rel (0) target = $region9
    $region8: #{tpu_custom_call.1} parent=1 // pred_region
      %27 = dma.done [#allocation5], 256
    $region9: #{tpu_custom_call.1} parent=1 // pred_fallthru
      _
    %s28 = sadd.s32 0, 0
    %p29 = scmp.eq.s32.totalorder 0, 0
    // Predicated region
    $region10: #{tpu_custom_call.1} parent=1 // pred_check
      %p30 = pneg %p29
    $region11: #{tpu_custom_call.1} parent=1 // pred_check_branch
      %32 = sbr.rel (%p30) target = $region13
    $region12: #{tpu_custom_call.1} parent=1 // pred_region
      %33 = vst [vmem:[#allocation2] sm:$0xff] inf
      %34 = vst [vmem:[#allocation2 + $0x8] sm:$0xff] inf
      %35 = vst [vmem:[#allocation3] sm:$0xff] -inf
      %36 = vst [vmem:[#allocation3 + $0x8] sm:$0xff] -inf
    $region13: #{tpu_custom_call.1} parent=1 // pred_fallthru
      _
    %v37 = vld [vmem:[#allocation4] sm:$0xff]
    %v38 = vld [vmem:[#allocation4 + $0x8] sm:$0xff]
    %v39 = vld [vmem:[#allocation2] sm:$0xff]
    %v40 = vld [vmem:[#allocation2 + $0x8] sm:$0xff]
    %v41 = vmin.f32 %v39, %v37
    %v42 = vmin.f32 %v40, %v38
    %43 = vst [vmem:[#allocation2] sm:$0xff] %v41
    %44 = vst [vmem:[#allocation2 + $0x8] sm:$0xff] %v42
    %v45 = vld [vmem:[#allocation3] sm:$0xff]
    %v46 = vld [vmem:[#allocation3 + $0x8] sm:$0xff]
    %v47 = vmax.f32 %v45, %v37
    %v48 = vmax.f32 %v46, %v38
    %49 = vst [vmem:[#allocation3] sm:$0xff] %v47
    %50 = vst [vmem:[#allocation3 + $0x8] sm:$0xff] %v48
    // Predicated region
    $region14: #{tpu_custom_call.1} parent=1 // pred_check
      %p51 = pneg %p29
    $region15: #{tpu_custom_call.1} parent=1 // pred_check_branch
      %53 = sbr.rel (%p51) target = $region17
    $region16: #{tpu_custom_call.1} parent=1 // pred_region
      %v54 = vld [vmem:[#allocation2] sm:$0xff]
      %v55 = vld [vmem:[#allocation2 + $0x8] sm:$0xff]
      %56 = vst [vmem:[#allocation7] sm:$0xff] %v54
      %57 = vst [vmem:[#allocation7 + $0x8] sm:$0xff] %v55
      %v58 = vld [vmem:[#allocation3] sm:$0xff]
      %v59 = vld [vmem:[#allocation3 + $0x8] sm:$0xff]
      %60 = vst [vmem:[#allocation8] sm:$0xff] %v58
      %61 = vst [vmem:[#allocation8 + $0x8] sm:$0xff] %v59
    $region17: #{tpu_custom_call.1} parent=1 // pred_fallthru
      _
    // Predicated region
    $region18: #{tpu_custom_call.1} parent=1 // pred_check
      _
    $region19: #{tpu_custom_call.1} parent=1 // pred_check_branch
      %63 = sbr.rel (0) target = $region21
    $region20: #{tpu_custom_call.1} parent=1 // pred_region
      %s65 = ssub.s32 256, 256
      %66 = vsyncadd [#allocation6], %s65
      %s68 = sshll.u32 [#allocation7], 4
      %s69 = int_to_ptr.vmem [resolvable:$true] %s68
      %71 = dma.vmem_to_hbm [thread:$0]  %s69, 256, %s1, [#allocation6]
    $region21: #{tpu_custom_call.1} parent=1 // pred_fallthru
      _
    // Predicated region
    $region22: #{tpu_custom_call.1} parent=1 // pred_check
      _
    $region23: #{tpu_custom_call.1} parent=1 // pred_check_branch
      %73 = sbr.rel (0) target = $region25
    $region24: #{tpu_custom_call.1} parent=1 // pred_region
      %s75 = ssub.s32 256, 256
      %76 = vsyncadd [#allocation9], %s75
      %s78 = sshll.u32 [#allocation8], 4
      %s79 = int_to_ptr.vmem [resolvable:$true] %s78
      %81 = dma.vmem_to_hbm [thread:$0]  %s79, 256, %s2, [#allocation9]
    $region25: #{tpu_custom_call.1} parent=1 // pred_fallthru
      _
    // Predicated region
    $region26: #{tpu_custom_call.1} parent=1 // pred_check
      _
    $region27: #{tpu_custom_call.1} parent=1 // pred_check_branch
      %83 = sbr.rel (0) target = $region29
    $region28: #{tpu_custom_call.1} parent=1 // pred_region
      %84 = dma.done [#allocation6], 256
    $region29: #{tpu_custom_call.1} parent=1 // pred_fallthru
      _
    // Predicated region
    $region30: #{tpu_custom_call.1} parent=1 // pred_check
      _
    $region31: #{tpu_custom_call.1} parent=1 // pred_check_branch
      %86 = sbr.rel (0) target = $region33
    $region32: #{tpu_custom_call.1} parent=1 // pred_region
      %87 = dma.done [#allocation9], 256
    $region33: #{tpu_custom_call.1} parent=1 // pred_fallthru
      _
    %88 = vsyncpa [#allocation5], 1
    %89 = vsyncpa [#allocation6], 1
    %90 = vsyncpa [#allocation9], 1

</llo_original>
